<compile_context>
chip_gen: v7x
topology: tpu7x:2x2x1
jax: 0.10.0
libtpu: 0.0.40
codegen_flags: <defaults>
</compile_context>

<pallas_src>
import math

import jax
import jax.numpy as jnp
from jax.experimental import pallas as pl
from jax.experimental.pallas import tpu as pltpu


def _round_up(n, m):
    return ((n + m - 1) // m) * m


def dueling_q_kernel(x_ref,
                     w1_ref, b1_ref, w2_ref, b2_ref,
                     wh1_ref, bh1_ref, wh2_ref, bh2_ref,
                     q_ref):
    """One batch tile of the dueling Q-network forward pass.

    Matmuls accumulate in f32 on the MXU (operands may be bf16); bias adds and
    ReLU run in f32 on the VPU.  The dueling combine is pre-folded into
    wh2 / bh2, so the final dot produces q directly.
    """
    # In-kernel cast of the f32 input tile to the compute dtype (free under MXU).
    x = x_ref[...].astype(w1_ref.dtype)

    # feature_layer: Linear -> ReLU -> Linear -> ReLU
    h = jnp.dot(x, w1_ref[...], preferred_element_type=jnp.float32) + b1_ref[...]
    h = jnp.maximum(h, 0.0)
    h = jnp.dot(h.astype(w2_ref.dtype), w2_ref[...],
                preferred_element_type=jnp.float32) + b2_ref[...]
    h = jnp.maximum(h, 0.0)

    # Fused value/advantage hidden layer: [hv | ha]
    hd = jnp.dot(h.astype(wh1_ref.dtype), wh1_ref[...],
                 preferred_element_type=jnp.float32) + bh1_ref[...]
    hd = jnp.maximum(hd, 0.0)

    # Output layer with the dueling combine folded into the weights -> q directly.
    q = jnp.dot(hd.astype(wh2_ref.dtype), wh2_ref[...],
                preferred_element_type=jnp.float32) + bh2_ref[...]
    q_ref[...] = q.astype(q_ref.dtype)


def pack_params(params, compute_dtype=jnp.bfloat16):
    """Fuse value/advantage streams, fold the dueling combine, cast weights.

    Weights are stored (in, out); biases stay float32 (added post-accumulation).
    All folding happens in f32, before any cast to the compute dtype.
    """
    h2 = params["wv1"].shape[1]
    action_dim = params["wa2"].shape[1]

    # First head layer: concat along the output axis -> hd = [hv | ha].
    wh1 = jnp.concatenate([params["wv1"], params["wa1"]], axis=1)   # (h1, 2*h2)
    bh1 = jnp.concatenate([params["bv1"], params["ba1"]], axis=1)   # (1, 2*h2)

    # Second head layer with the dueling combine folded in:
    #   q = hv @ (wv2 * 1_A) + ha @ (wa2 - colmean(wa2)) + (bv2 + ba2 - mean(ba2))
    wv2 = params["wv2"].astype(jnp.float32)                         # (h2, 1)
    wa2 = params["wa2"].astype(jnp.float32)                         # (h2, A)
    wa2_centered = wa2 - jnp.mean(wa2, axis=1, keepdims=True)       # (h2, A)
    wh2 = jnp.concatenate(
        [jnp.broadcast_to(wv2, (h2, action_dim)), wa2_centered], axis=0)  # (2*h2, A)
    bh2 = (params["bv2"] + params["ba2"]
           - jnp.mean(params["ba2"], axis=1, keepdims=True))         # (1, A)

    packed = dict(w1=params["w1"], b1=params["b1"],
                  w2=params["w2"], b2=params["b2"],
                  wh1=wh1, bh1=bh1, wh2=wh2, bh2=bh2)
    out = {}
    for k, v in packed.items():
        out[k] = v.astype(compute_dtype) if k.startswith("w") else v.astype(jnp.float32)
    return out


def dueling_q_forward(x, params, *, batch_tile=1024, compute_dtype=jnp.bfloat16):
    """x: (B, state_dim) float32. params: dict of (in, out) weights / (1, out) biases."""
    B, state_dim = x.shape
    action_dim = params["wa2"].shape[1]

    packed = pack_params(params, compute_dtype)

    # Batch tile: multiple of 8 sublanes (x crosses the boundary in f32, so 8 is
    # the required sublane alignment; in-register bf16 casts are handled by Mosaic).
    tb = min(_round_up(batch_tile, 8), _round_up(B, 8))
    # For large batches keep the number of "parallel" grid steps even so both
    # v7x TensorCores get balanced work.
    if B > 256:
        steps = pl.cdiv(B, tb)
        if steps % 2 == 1:
            tb = _round_up(pl.cdiv(B, steps + 1), 8)
    grid = (pl.cdiv(B, tb),)   # ragged last block handled by Pallas boundary masking

    param_order = ["w1", "b1", "w2", "b2", "wh1", "bh1", "wh2", "bh2"]
    param_arrays = [packed[k] for k in param_order]

    in_specs = [pl.BlockSpec((tb, state_dim), lambda i: (i, 0))] + [
        pl.BlockSpec(a.shape, lambda i: (0, 0)) for a in param_arrays
    ]
    out_specs = pl.BlockSpec((tb, action_dim), lambda i: (i, 0))

    return pl.pallas_call(
        dueling_q_kernel,
        out_shape=jax.ShapeDtypeStruct((B, action_dim), jnp.float32),
        grid=grid,
        in_specs=in_specs,
        out_specs=out_specs,
        compiler_params=pltpu.CompilerParams(
            dimension_semantics=("parallel",)),
    )(x, *param_arrays)


def init_dueling_params(key, state_dim, action_dim, hidden_layers=(128, 64, 32)):
    """Deterministic init mimicking PyTorch nn.Linear default U(-1/sqrt(fan_in), +)."""
    h0, h1, h2 = hidden_layers
    dims = [
        ("w1", state_dim, h0), ("w2", h0, h1),
        ("wv1", h1, h2), ("wv2", h2, 1),
        ("wa1", h1, h2), ("wa2", h2, action_dim),
    ]
    params = {}
    for name, fan_in, fan_out in dims:
        key, kw, kb = jax.random.split(key, 3)
        bound = 1.0 / math.sqrt(fan_in)
        # stored as (in, out): transposed relative to PyTorch's (out, in)
        params[name] = jax.random.uniform(kw, (fan_in, fan_out), jnp.float32,
                                          minval=-bound, maxval=bound)
        params[name.replace("w", "b")] = jax.random.uniform(
            kb, (1, fan_out), jnp.float32, minval=-bound, maxval=bound)
    return params


def dueling_q_reference(x, p):
    """Pure-JAX reference (un-fused params) for correctness checking."""
    h = jax.nn.relu(x @ p["w1"] + p["b1"])
    h = jax.nn.relu(h @ p["w2"] + p["b2"])
    v = jax.nn.relu(h @ p["wv1"] + p["bv1"]) @ p["wv2"] + p["bv2"]
    a = jax.nn.relu(h @ p["wa1"] + p["ba1"]) @ p["wa2"] + p["ba2"]
    return v + (a - jnp.mean(a, axis=1, keepdims=True))


if __name__ == "__main__":
    key = jax.random.PRNGKey(0)
    batch, state_dim, action_dim = 8, 16, 4
    hidden_layers = (128, 64, 32)

    key, kx, kp = jax.random.split(key, 3)
    x = jax.random.normal(kx, (batch, state_dim), dtype=jnp.float32)
    params = init_dueling_params(kp, state_dim, action_dim, hidden_layers)

    # f32 compute path, tiny batch (single grid step). Folded combine changes
    # summation order slightly -> compare with a small tolerance, not bit-exact.
    q = jax.block_until_ready(dueling_q_forward(x, params, compute_dtype=jnp.float32))
    q_ref = dueling_q_reference(x, params)
    assert q.shape == (batch, action_dim)
    assert jnp.allclose(q, q_ref, atol=1e-4, rtol=1e-4), "f32 small-batch mismatch"

    # Non-tile-aligned larger batch: exercises ragged last block + even grid split.
    xb = jax.random.normal(jax.random.PRNGKey(1), (300, state_dim), dtype=jnp.float32)
    qb = jax.block_until_ready(
        dueling_q_forward(xb, params, batch_tile=128, compute_dtype=jnp.float32))
    qb_ref = dueling_q_reference(xb, params)
    assert qb.shape == (300, action_dim)
    assert jnp.allclose(qb, qb_ref, atol=1e-4, rtol=1e-4), "f32 ragged-batch mismatch"

    # Default bf16 operands / f32 accumulation (preferred MXU path on all gens).
    qbf = jax.block_until_ready(dueling_q_forward(xb, params, batch_tile=128))
    assert qbf.shape == (300, action_dim)
    assert jnp.allclose(qbf, qb_ref, atol=0.15, rtol=0.15), "bf16 path mismatch"

    print("KERNEL_OK")
</pallas_src>

<mosaic_0001>
module attributes {stable_mosaic.version = 11 : i64} {
  func.func @dueling_q_kernel(%arg0: i32, %arg1: memref<8x16xf32, #tpu.memory_space<vmem>>, %arg2: memref<16x128xf32, #tpu.memory_space<vmem>>, %arg3: memref<1x128xf32, #tpu.memory_space<vmem>>, %arg4: memref<128x64xf32, #tpu.memory_space<vmem>>, %arg5: memref<1x64xf32, #tpu.memory_space<vmem>>, %arg6: memref<64x64xf32, #tpu.memory_space<vmem>>, %arg7: memref<1x64xf32, #tpu.memory_space<vmem>>, %arg8: memref<64x4xf32, #tpu.memory_space<vmem>>, %arg9: memref<1x4xf32, #tpu.memory_space<vmem>>, %arg10: memref<8x4xf32, #tpu.memory_space<vmem>>) attributes {dimension_semantics = [#tpu.dimension_semantics<parallel>], iteration_bounds = array<i64: 1>, scalar_prefetch = 0 : i64, scratch_operands = 0 : i64, tpu.core_type = #tpu.core_type<tc>, window_params = [{transform_indices = @transform_0, window_bounds = array<i64: 8, 16>}, {pipeline_mode = #tpu.pipeline_mode<synchronous>, transform_indices = @transform_1, window_bounds = array<i64: 16, 128>}, {pipeline_mode = #tpu.pipeline_mode<synchronous>, transform_indices = @transform_2, window_bounds = array<i64: 1, 128>}, {pipeline_mode = #tpu.pipeline_mode<synchronous>, transform_indices = @transform_3, window_bounds = array<i64: 128, 64>}, {pipeline_mode = #tpu.pipeline_mode<synchronous>, transform_indices = @transform_4, window_bounds = array<i64: 1, 64>}, {pipeline_mode = #tpu.pipeline_mode<synchronous>, transform_indices = @transform_5, window_bounds = array<i64: 64, 64>}, {pipeline_mode = #tpu.pipeline_mode<synchronous>, transform_indices = @transform_6, window_bounds = array<i64: 1, 64>}, {pipeline_mode = #tpu.pipeline_mode<synchronous>, transform_indices = @transform_7, window_bounds = array<i64: 64, 4>}, {pipeline_mode = #tpu.pipeline_mode<synchronous>, transform_indices = @transform_8, window_bounds = array<i64: 1, 4>}, {transform_indices = @transform_9, window_bounds = array<i64: 8, 4>}]} {
    %c0 = arith.constant 0 : index
    %c0_0 = arith.constant 0 : index
    %0 = vector.load %arg1[%c0, %c0_0] : memref<8x16xf32, #tpu.memory_space<vmem>>, vector<8x16xf32>
    %c0_1 = arith.constant 0 : index
    %c0_2 = arith.constant 0 : index
    %1 = vector.load %arg2[%c0_1, %c0_2] : memref<16x128xf32, #tpu.memory_space<vmem>>, vector<16x128xf32>
    %cst = arith.constant dense<0.000000e+00> : vector<8x128xf32>
    %2 = tpu.matmul %0, %1, %cst {dimension_numbers = #tpu.dot_dimension_numbers<[1], [0], [0], [1], [0, 0, 1, 1], [], []>} : vector<8x16xf32>, vector<16x128xf32>, vector<8x128xf32> -> vector<8x128xf32>
    %c0_3 = arith.constant 0 : index
    %c0_4 = arith.constant 0 : index
    %3 = vector.load %arg3[%c0_3, %c0_4] : memref<1x128xf32, #tpu.memory_space<vmem>>, vector<1x128xf32>
    %4 = vector.broadcast %3 : vector<1x128xf32> to vector<8x128xf32>
    %5 = arith.addf %2, %4 : vector<8x128xf32>
    %cst_5 = arith.constant 0.000000e+00 : f32
    %6 = vector.broadcast %cst_5 : f32 to vector<8x128xf32>
    %7 = arith.maximumf %5, %6 : vector<8x128xf32>
    %c0_6 = arith.constant 0 : index
    %c0_7 = arith.constant 0 : index
    %8 = vector.load %arg4[%c0_6, %c0_7] : memref<128x64xf32, #tpu.memory_space<vmem>>, vector<128x64xf32>
    %cst_8 = arith.constant dense<0.000000e+00> : vector<8x64xf32>
    %9 = tpu.matmul %7, %8, %cst_8 {dimension_numbers = #tpu.dot_dimension_numbers<[1], [0], [0], [1], [0, 0, 1, 1], [], []>} : vector<8x128xf32>, vector<128x64xf32>, vector<8x64xf32> -> vector<8x64xf32>
    %c0_9 = arith.constant 0 : index
    %c0_10 = arith.constant 0 : index
    %10 = vector.load %arg5[%c0_9, %c0_10] : memref<1x64xf32, #tpu.memory_space<vmem>>, vector<1x64xf32>
    %11 = vector.broadcast %10 : vector<1x64xf32> to vector<8x64xf32>
    %12 = arith.addf %9, %11 : vector<8x64xf32>
    %cst_11 = arith.constant 0.000000e+00 : f32
    %13 = vector.broadcast %cst_11 : f32 to vector<8x64xf32>
    %14 = arith.maximumf %12, %13 : vector<8x64xf32>
    %c0_12 = arith.constant 0 : index
    %c0_13 = arith.constant 0 : index
    %15 = vector.load %arg6[%c0_12, %c0_13] : memref<64x64xf32, #tpu.memory_space<vmem>>, vector<64x64xf32>
    %cst_14 = arith.constant dense<0.000000e+00> : vector<8x64xf32>
    %16 = tpu.matmul %14, %15, %cst_14 {dimension_numbers = #tpu.dot_dimension_numbers<[1], [0], [0], [1], [0, 0, 1, 1], [], []>} : vector<8x64xf32>, vector<64x64xf32>, vector<8x64xf32> -> vector<8x64xf32>
    %c0_15 = arith.constant 0 : index
    %c0_16 = arith.constant 0 : index
    %17 = vector.load %arg7[%c0_15, %c0_16] : memref<1x64xf32, #tpu.memory_space<vmem>>, vector<1x64xf32>
    %18 = vector.broadcast %17 : vector<1x64xf32> to vector<8x64xf32>
    %19 = arith.addf %16, %18 : vector<8x64xf32>
    %cst_17 = arith.constant 0.000000e+00 : f32
    %20 = vector.broadcast %cst_17 : f32 to vector<8x64xf32>
    %21 = arith.maximumf %19, %20 : vector<8x64xf32>
    %c0_18 = arith.constant 0 : index
    %c0_19 = arith.constant 0 : index
    %22 = vector.load %arg8[%c0_18, %c0_19] : memref<64x4xf32, #tpu.memory_space<vmem>>, vector<64x4xf32>
    %cst_20 = arith.constant dense<0.000000e+00> : vector<8x4xf32>
    %23 = tpu.matmul %21, %22, %cst_20 {dimension_numbers = #tpu.dot_dimension_numbers<[1], [0], [0], [1], [0, 0, 1, 1], [], []>} : vector<8x64xf32>, vector<64x4xf32>, vector<8x4xf32> -> vector<8x4xf32>
    %c0_21 = arith.constant 0 : index
    %c0_22 = arith.constant 0 : index
    %24 = vector.load %arg9[%c0_21, %c0_22] : memref<1x4xf32, #tpu.memory_space<vmem>>, vector<1x4xf32>
    %25 = vector.broadcast %24 : vector<1x4xf32> to vector<8x4xf32>
    %26 = arith.addf %23, %25 : vector<8x4xf32>
    %c0_23 = arith.constant 0 : index
    %c0_24 = arith.constant 0 : index
    %27 = vector.load %arg10[%c0_23, %c0_24] : memref<8x4xf32, #tpu.memory_space<vmem>>, vector<8x4xf32>
    tpu.vector_store %arg10[%c0_23, %c0_24], %26 {strides = array<i32>} : memref<8x4xf32, #tpu.memory_space<vmem>>, vector<8x4xf32>,
    return
  }
  func.func @transform_0(%arg0: i32) -> (i32, i32) {
    %c0_i32 = arith.constant 0 : i32
    %c0_i32_0 = arith.constant 0 : i32
    return %arg0, %c0_i32 : i32, i32
  }
  func.func @transform_1(%arg0: i32) -> (i32, i32) {
    %c0_i32 = arith.constant 0 : i32
    %c0_i32_0 = arith.constant 0 : i32
    %c0_i32_1 = arith.constant 0 : i32
    return %c0_i32, %c0_i32_0 : i32, i32
  }
  func.func @transform_2(%arg0: i32) -> (i32, i32) {
    %c0_i32 = arith.constant 0 : i32
    %c0_i32_0 = arith.constant 0 : i32
    %c0_i32_1 = arith.constant 0 : i32
    return %c0_i32, %c0_i32_0 : i32, i32
  }
  func.func @transform_3(%arg0: i32) -> (i32, i32) {
    %c0_i32 = arith.constant 0 : i32
    %c0_i32_0 = arith.constant 0 : i32
    %c0_i32_1 = arith.constant 0 : i32
    return %c0_i32, %c0_i32_0 : i32, i32
  }
  func.func @transform_4(%arg0: i32) -> (i32, i32) {
    %c0_i32 = arith.constant 0 : i32
    %c0_i32_0 = arith.constant 0 : i32
    %c0_i32_1 = arith.constant 0 : i32
    return %c0_i32, %c0_i32_0 : i32, i32
  }
  func.func @transform_5(%arg0: i32) -> (i32, i32) {
    %c0_i32 = arith.constant 0 : i32
    %c0_i32_0 = arith.constant 0 : i32
    %c0_i32_1 = arith.constant 0 : i32
    return %c0_i32, %c0_i32_0 : i32, i32
  }
  func.func @transform_6(%arg0: i32) -> (i32, i32) {
    %c0_i32 = arith.constant 0 : i32
    %c0_i32_0 = arith.constant 0 : i32
    %c0_i32_1 = arith.constant 0 : i32
    return %c0_i32, %c0_i32_0 : i32, i32
  }
  func.func @transform_7(%arg0: i32) -> (i32, i32) {
    %c0_i32 = arith.constant 0 : i32
    %c0_i32_0 = arith.constant 0 : i32
    %c0_i32_1 = arith.constant 0 : i32
    return %c0_i32, %c0_i32_0 : i32, i32
  }
  func.func @transform_8(%arg0: i32) -> (i32, i32) {
    %c0_i32 = arith.constant 0 : i32
    %c0_i32_0 = arith.constant 0 : i32
    %c0_i32_1 = arith.constant 0 : i32
    return %c0_i32, %c0_i32_0 : i32, i32
  }
  func.func @transform_9(%arg0: i32) -> (i32, i32) {
    %c0_i32 = arith.constant 0 : i32
    %c0_i32_0 = arith.constant 0 : i32
    return %arg0, %c0_i32 : i32, i32
  }
}

</mosaic_0001>

<llo_original>
// kernel: tpu_custom_call.1
$region0: #{tpu_custom_call.1}
  #allocation0 [shape = 'u32[]', space=smem, size = 0x4, offset = 0x4, fixed_abs, tag = 'smem constant byte address 0x4 - core index']
  #allocation1 [shape = 'u32[144,128]{1,0:T(1,128)}', space=vmem, size = 0x12000, scoped, tag = 'internal scratch']
  %s0 = inlined_call_operand.vmem [shape: f32[8,16], index: 0, kind: input, shape index: {}]
  %s1 = inlined_call_operand.vmem [shape: f32[16,128], index: 1, kind: input, shape index: {}]
  %s2 = inlined_call_operand.vmem [shape: f32[1,128], index: 2, kind: input, shape index: {}]
  %s3 = inlined_call_operand.vmem [shape: f32[128,64], index: 3, kind: input, shape index: {}]
  %s4 = inlined_call_operand.vmem [shape: f32[1,64], index: 4, kind: input, shape index: {}]
  %s5 = inlined_call_operand.vmem [shape: f32[64,64], index: 5, kind: input, shape index: {}]
  %s6 = inlined_call_operand.vmem [shape: f32[1,64], index: 6, kind: input, shape index: {}]
  %s7 = inlined_call_operand.vmem [shape: f32[64,4], index: 7, kind: input, shape index: {}]
  %s8 = inlined_call_operand.vmem [shape: f32[1,4], index: 8, kind: input, shape index: {}]
  %s9 = inlined_call_operand.vmem [shape: f32[8,4], index: 9, kind: output, shape index: {}]
  %s10 = sld [smem:[#allocation0]]
  $region46: #{tpu_custom_call.1} parent=0
    _
  %s12 = ssub.s32 1, %s10
  %s13 = scalar_select 0, %s12, %s10
  // Predicated region
  $region2: #{tpu_custom_call.1} parent=0 // pred_check
    _
  $region3: #{tpu_custom_call.1} parent=0 // pred_check_branch
    %15 = sbr.rel (0) target = $region5
  $region4: #{tpu_custom_call.1} parent=0 // pred_region
    _
  $region5: #{tpu_custom_call.1} parent=0 // pred_fallthru
    _
  // Predicated region
  $region6: #{tpu_custom_call.1} parent=0 // pred_check
    _
  $region7: #{tpu_custom_call.1} parent=0 // pred_check_branch
    %17 = sbr.rel (0) target = $region9
  $region8: #{tpu_custom_call.1} parent=0 // pred_region
    _
  $region9: #{tpu_custom_call.1} parent=0 // pred_fallthru
    _
  // Predicated region
  $region10: #{tpu_custom_call.1} parent=0 // pred_check
    _
  $region11: #{tpu_custom_call.1} parent=0 // pred_check_branch
    %19 = sbr.rel (0) target = $region13
  $region12: #{tpu_custom_call.1} parent=0 // pred_region
    _
  $region13: #{tpu_custom_call.1} parent=0 // pred_fallthru
    _
  // Predicated region
  $region14: #{tpu_custom_call.1} parent=0 // pred_check
    _
  $region15: #{tpu_custom_call.1} parent=0 // pred_check_branch
    %21 = sbr.rel (0) target = $region17
  $region16: #{tpu_custom_call.1} parent=0 // pred_region
    _
  $region17: #{tpu_custom_call.1} parent=0 // pred_fallthru
    _
  // Predicated region
  $region18: #{tpu_custom_call.1} parent=0 // pred_check
    _
  $region19: #{tpu_custom_call.1} parent=0 // pred_check_branch
    %23 = sbr.rel (0) target = $region21
  $region20: #{tpu_custom_call.1} parent=0 // pred_region
    _
  $region21: #{tpu_custom_call.1} parent=0 // pred_fallthru
    _
  // Predicated region
  $region22: #{tpu_custom_call.1} parent=0 // pred_check
    _
  $region23: #{tpu_custom_call.1} parent=0 // pred_check_branch
    %25 = sbr.rel (0) target = $region25
  $region24: #{tpu_custom_call.1} parent=0 // pred_region
    _
  $region25: #{tpu_custom_call.1} parent=0 // pred_fallthru
    _
  // Predicated region
  $region26: #{tpu_custom_call.1} parent=0 // pred_check
    _
  $region27: #{tpu_custom_call.1} parent=0 // pred_check_branch
    %27 = sbr.rel (0) target = $region29
  $region28: #{tpu_custom_call.1} parent=0 // pred_region
    _
  $region29: #{tpu_custom_call.1} parent=0 // pred_fallthru
    _
  // Predicated region
  $region30: #{tpu_custom_call.1} parent=0 // pred_check
    _
  $region31: #{tpu_custom_call.1} parent=0 // pred_check_branch
    %29 = sbr.rel (0) target = $region33
  $region32: #{tpu_custom_call.1} parent=0 // pred_region
    _
  $region33: #{tpu_custom_call.1} parent=0 // pred_fallthru
    _
  // Predicated region
  $region34: #{tpu_custom_call.1} parent=0 // pred_check
    _
  $region35: #{tpu_custom_call.1} parent=0 // pred_check_branch
    %31 = sbr.rel (0) target = $region37
  $region36: #{tpu_custom_call.1} parent=0 // pred_region
    _
  $region37: #{tpu_custom_call.1} parent=0 // pred_fallthru
    _
  %v32 = vld [vmem:[%s0] sm:$0xff]
  %v33 = vld [vmem:[%s1] sm:$0xff]
  %v34 = vld [vmem:[%s1 + $0x8] sm:$0xff]
  %v35 = vld [vmem:[%s2] sm:$0x1]
  %v37 = vlaneseq
  %v38 = vshrl.u32 %v37, 7
  %v39 = vsub.s32 0, %v38
  %v40 = vrot.slane %v35, %v39
  %vm42 = vcmask 130048
  %v44 = vsel %vm42, %v32, 0
  %46 = vmatprep.subr.mxu0 0.0
  %47 = vmatpush1.msra.mxu0 %v33
  %48 = vmatprep.subr.mxu0 0.0
  %49 = vmatpush1.msra.mxu0 %v34
  %50 = vmatprep.subr.mxu0 0.0
  %51 = vmatpush1.msra.mxu0 0.0
  %52 = vmatprep.subr.mxu0 0.0
  %53 = vmatpush1.msra.mxu0 0.0
  %54 = vmatprep.subr.mxu0 0.0
  %55 = vmatpush1.msra.mxu0 0.0
  %56 = vmatprep.subr.mxu0 0.0
  %57 = vmatpush1.msra.mxu0 0.0
  %58 = vmatprep.subr.mxu0 0.0
  %59 = vmatpush1.msra.mxu0 0.0
  %60 = vmatprep.subr.mxu0 0.0
  %61 = vmatpush1.msra.mxu0 0.0
  %62 = vmatprep.subr.mxu0 0.0
  %63 = vmatpush1.msra.mxu0 0.0
  %64 = vmatprep.subr.mxu0 0.0
  %65 = vmatpush1.msra.mxu0 0.0
  %66 = vmatprep.subr.mxu0 0.0
  %67 = vmatpush1.msra.mxu0 0.0
  %68 = vmatprep.subr.mxu0 0.0
  %69 = vmatpush1.msra.mxu0 0.0
  %70 = vmatprep.subr.mxu0 0.0
  %71 = vmatpush1.msra.mxu0 0.0
  %72 = vmatprep.subr.mxu0 0.0
  %73 = vmatpush1.msra.mxu0 0.0
  %74 = vmatprep.subr.mxu0 0.0
  %75 = vmatpush1.msra.mxu0 0.0
  %76 = vmatprep.subr.mxu0 0.0
  %77 = vmatpush1.msra.mxu0 0.0
  %78 = vmatprep.subr.mxu0 0.0
  %79 = vmatpush1.msra.mxu0 0.0
  %80 = vmatprep.subr.mxu0 0.0
  %81 = vmatpush1.msra.mxu0 0.0
  %82 = vmatprep.subr.mxu0 0.0
  %83 = vmatpush1.msra.mxu0 0.0
  %84 = vmatprep.subr.mxu0 0.0
  %85 = vmatpush1.msra.mxu0 0.0
  %86 = vmatprep.subr.mxu0 0.0
  %87 = vmatpush1.msra.mxu0 0.0
  %88 = vmatprep.subr.mxu0 0.0
  %89 = vmatpush1.msra.mxu0 0.0
  %90 = vmatprep.subr.mxu0 0.0
  %91 = vmatpush1.msra.mxu0 0.0
  %92 = vmatprep.subr.mxu0 0.0
  %93 = vmatpush1.msra.mxu0 0.0
  %94 = vmatprep.subr.mxu0 0.0
  %95 = vmatpush1.msra.mxu0 0.0
  %96 = vmatprep.subr.mxu0 0.0
  %97 = vmatpush1.msra.mxu0 0.0
  %98 = vmatprep.subr.mxu0 0.0
  %99 = vmatpush1.msra.mxu0 0.0
  %100 = vmatprep.subr.mxu0 0.0
  %101 = vmatpush1.msra.mxu0 0.0
  %102 = vmatprep.subr.mxu0 0.0
  %103 = vmatpush1.msra.mxu0 0.0
  %104 = vmatprep.subr.mxu0 0.0
  %105 = vmatpush1.msra.mxu0 0.0
  %106 = vmatprep.subr.mxu0 0.0
  %107 = vmatpush1.msra.mxu0 0.0
  %108 = vmatprep.subr.mxu0 0.0
  %109 = vmatpush1.msra.mxu0 0.0
  %110 = vmatprep.mubr.f32.mxu0 0.0
  %111 = vmatmul.mubr.f32.gmra.mrb[0].mxu0 %v44
  %v112 = vpop.f32.mrb[0].mxu0
  %v113 = vadd.f32 %v40, %v112
  %v114 = vpop.f32.mrb[0].mxu0
  %115 = vdwg.mxu0
  %v116 = vmax.f32 %v113, 0.0
  %v117 = vld [vmem:[%s3] sm:$0xff]
  %v118 = vld [vmem:[%s3 + $0x8] sm:$0xff]
  %v119 = vld [vmem:[%s3 + $0x10] sm:$0xff]
  %v120 = vld [vmem:[%s3 + $0x18] sm:$0xff]
  %v121 = vld [vmem:[%s3 + $0x20] sm:$0xff]
  %v122 = vld [vmem:[%s3 + $0x28] sm:$0xff]
  %v123 = vld [vmem:[%s3 + $0x30] sm:$0xff]
  %v124 = vld [vmem:[%s3 + $0x38] sm:$0xff]
  %v125 = vld [vmem:[%s3 + $0x40] sm:$0xff]
  %v126 = vld [vmem:[%s3 + $0x48] sm:$0xff]
  %v127 = vld [vmem:[%s3 + $0x50] sm:$0xff]
  %v128 = vld [vmem:[%s3 + $0x58] sm:$0xff]
  %v129 = vld [vmem:[%s3 + $0x60] sm:$0xff]
  %v130 = vld [vmem:[%s3 + $0x68] sm:$0xff]
  %v131 = vld [vmem:[%s3 + $0x70] sm:$0xff]
  %v132 = vld [vmem:[%s3 + $0x78] sm:$0xff]
  %v133 = vld [vmem:[%s4] sm:$0x1]
  %v135 = vlaneseq
  %v136 = vshrl.u32 %v135, 7
  %v137 = vsub.s32 0, %v136
  %v138 = vrot.slane %v133, %v137
  %140 = vmatprep.subr.mxu0 0.0
  %141 = vmatpush1.msra.mxu0 %v117
  %142 = vmatprep.subr.mxu0 0.0
  %143 = vmatpush1.msra.mxu0 %v118
  %144 = vmatprep.subr.mxu0 0.0
  %145 = vmatpush1.msra.mxu0 %v119
  %146 = vmatprep.subr.mxu0 0.0
  %147 = vmatpush1.msra.mxu0 %v120
  %148 = vmatprep.subr.mxu0 0.0
  %149 = vmatpush1.msra.mxu0 %v121
  %150 = vmatprep.subr.mxu0 0.0
  %151 = vmatpush1.msra.mxu0 %v122
  %152 = vmatprep.subr.mxu0 0.0
  %153 = vmatpush1.msra.mxu0 %v123
  %154 = vmatprep.subr.mxu0 0.0
  %155 = vmatpush1.msra.mxu0 %v124
  %156 = vmatprep.subr.mxu0 0.0
  %157 = vmatpush1.msra.mxu0 %v125
  %158 = vmatprep.subr.mxu0 0.0
  %159 = vmatpush1.msra.mxu0 %v126
  %160 = vmatprep.subr.mxu0 0.0
  %161 = vmatpush1.msra.mxu0 %v127
  %162 = vmatprep.subr.mxu0 0.0
  %163 = vmatpush1.msra.mxu0 %v128
  %164 = vmatprep.subr.mxu0 0.0
  %165 = vmatpush1.msra.mxu0 %v129
  %166 = vmatprep.subr.mxu0 0.0
  %167 = vmatpush1.msra.mxu0 %v130
  %168 = vmatprep.subr.mxu0 0.0
  %169 = vmatpush1.msra.mxu0 %v131
  %170 = vmatprep.subr.mxu0 0.0
  %171 = vmatpush1.msra.mxu0 %v132
  %172 = vmatprep.subr.mxu0 0.0
  %173 = vmatpush1.msra.mxu0 0.0
  %174 = vmatprep.subr.mxu0 0.0
  %175 = vmatpush1.msra.mxu0 0.0
  %176 = vmatprep.subr.mxu0 0.0
  %177 = vmatpush1.msra.mxu0 0.0
  %178 = vmatprep.subr.mxu0 0.0
  %179 = vmatpush1.msra.mxu0 0.0
  %180 = vmatprep.subr.mxu0 0.0
  %181 = vmatpush1.msra.mxu0 0.0
  %182 = vmatprep.subr.mxu0 0.0
  %183 = vmatpush1.msra.mxu0 0.0
  %184 = vmatprep.subr.mxu0 0.0
  %185 = vmatpush1.msra.mxu0 0.0
  %186 = vmatprep.subr.mxu0 0.0
  %187 = vmatpush1.msra.mxu0 0.0
  %188 = vmatprep.subr.mxu0 0.0
  %189 = vmatpush1.msra.mxu0 0.0
  %190 = vmatprep.subr.mxu0 0.0
  %191 = vmatpush1.msra.mxu0 0.0
  %192 = vmatprep.subr.mxu0 0.0
  %193 = vmatpush1.msra.mxu0 0.0
  %194 = vmatprep.subr.mxu0 0.0
  %195 = vmatpush1.msra.mxu0 0.0
  %196 = vmatprep.subr.mxu0 0.0
  %197 = vmatpush1.msra.mxu0 0.0
  %198 = vmatprep.subr.mxu0 0.0
  %199 = vmatpush1.msra.mxu0 0.0
  %200 = vmatprep.subr.mxu0 0.0
  %201 = vmatpush1.msra.mxu0 0.0
  %202 = vmatprep.subr.mxu0 0.0
  %203 = vmatpush1.msra.mxu0 0.0
  %204 = vmatprep.mubr.f32.mxu0 0.0
  %205 = vmatmul.mubr.f32.gmra.mrb[0].mxu0 %v116
  %v206 = vpop.f32.mrb[0].mxu0
  %v207 = vadd.f32 %v138, %v206
  %v208 = vpop.f32.mrb[0].mxu0
  %209 = vdwg.mxu0
  %v210 = vmax.f32 %v207, 0.0
  %v211 = vld [vmem:[%s5] sm:$0xff]
  %v212 = vld [vmem:[%s5 + $0x8] sm:$0xff]
  %v213 = vld [vmem:[%s5 + $0x10] sm:$0xff]
  %v214 = vld [vmem:[%s5 + $0x18] sm:$0xff]
  %v215 = vld [vmem:[%s5 + $0x20] sm:$0xff]
  %v216 = vld [vmem:[%s5 + $0x28] sm:$0xff]
  %v217 = vld [vmem:[%s5 + $0x30] sm:$0xff]
  %v218 = vld [vmem:[%s5 + $0x38] sm:$0xff]
  %v219 = vld [vmem:[%s6] sm:$0x1]
  %v221 = vlaneseq
  %v222 = vshrl.u32 %v221, 7
  %v223 = vsub.s32 0, %v222
  %v224 = vrot.slane %v219, %v223
  %vm226 = vcmask 523264
  %v228 = vsel %vm226, %v210, 0
  %230 = vmatprep.subr.mxu0 0.0
  %231 = vmatpush1.msra.mxu0 %v211
  %232 = vmatprep.subr.mxu0 0.0
  %233 = vmatpush1.msra.mxu0 %v212
  %234 = vmatprep.subr.mxu0 0.0
  %235 = vmatpush1.msra.mxu0 %v213
  %236 = vmatprep.subr.mxu0 0.0
  %237 = vmatpush1.msra.mxu0 %v214
  %238 = vmatprep.subr.mxu0 0.0
  %239 = vmatpush1.msra.mxu0 %v215
  %240 = vmatprep.subr.mxu0 0.0
  %241 = vmatpush1.msra.mxu0 %v216
  %242 = vmatprep.subr.mxu0 0.0
  %243 = vmatpush1.msra.mxu0 %v217
  %244 = vmatprep.subr.mxu0 0.0
  %245 = vmatpush1.msra.mxu0 %v218
  %246 = vmatprep.subr.mxu0 0.0
  %247 = vmatpush1.msra.mxu0 0.0
  %248 = vmatprep.subr.mxu0 0.0
  %249 = vmatpush1.msra.mxu0 0.0
  %250 = vmatprep.subr.mxu0 0.0
  %251 = vmatpush1.msra.mxu0 0.0
  %252 = vmatprep.subr.mxu0 0.0
  %253 = vmatpush1.msra.mxu0 0.0
  %254 = vmatprep.subr.mxu0 0.0
  %255 = vmatpush1.msra.mxu0 0.0
  %256 = vmatprep.subr.mxu0 0.0
  %257 = vmatpush1.msra.mxu0 0.0
  %258 = vmatprep.subr.mxu0 0.0
  %259 = vmatpush1.msra.mxu0 0.0
  %260 = vmatprep.subr.mxu0 0.0
  %261 = vmatpush1.msra.mxu0 0.0
  %262 = vmatprep.subr.mxu0 0.0
  %263 = vmatpush1.msra.mxu0 0.0
  %264 = vmatprep.subr.mxu0 0.0
  %265 = vmatpush1.msra.mxu0 0.0
  %266 = vmatprep.subr.mxu0 0.0
  %267 = vmatpush1.msra.mxu0 0.0
  %268 = vmatprep.subr.mxu0 0.0
  %269 = vmatpush1.msra.mxu0 0.0
  %270 = vmatprep.subr.mxu0 0.0
  %271 = vmatpush1.msra.mxu0 0.0
  %272 = vmatprep.subr.mxu0 0.0
  %273 = vmatpush1.msra.mxu0 0.0
  %274 = vmatprep.subr.mxu0 0.0
  %275 = vmatpush1.msra.mxu0 0.0
  %276 = vmatprep.subr.mxu0 0.0
  %277 = vmatpush1.msra.mxu0 0.0
  %278 = vmatprep.subr.mxu0 0.0
  %279 = vmatpush1.msra.mxu0 0.0
  %280 = vmatprep.subr.mxu0 0.0
  %281 = vmatpush1.msra.mxu0 0.0
  %282 = vmatprep.subr.mxu0 0.0
  %283 = vmatpush1.msra.mxu0 0.0
  %284 = vmatprep.subr.mxu0 0.0
  %285 = vmatpush1.msra.mxu0 0.0
  %286 = vmatprep.subr.mxu0 0.0
  %287 = vmatpush1.msra.mxu0 0.0
  %288 = vmatprep.subr.mxu0 0.0
  %289 = vmatpush1.msra.mxu0 0.0
  %290 = vmatprep.subr.mxu0 0.0
  %291 = vmatpush1.msra.mxu0 0.0
  %292 = vmatprep.subr.mxu0 0.0
  %293 = vmatpush1.msra.mxu0 0.0
  %294 = vmatprep.mubr.f32.mxu0 0.0
  %295 = vmatmul.mubr.f32.gmra.mrb[0].mxu0 %v228
  %v296 = vpop.f32.mrb[0].mxu0
  %v297 = vadd.f32 %v224, %v296
  %v298 = vpop.f32.mrb[0].mxu0
  %299 = vdwg.mxu0
  %v300 = vmax.f32 %v297, 0.0
  %v301 = vld [vmem:[%s7] sm:$0xff]
  %v302 = vld [vmem:[%s7 + $0x8] sm:$0xff]
  %v303 = vld [vmem:[%s7 + $0x10] sm:$0xff]
  %v304 = vld [vmem:[%s7 + $0x18] sm:$0xff]
  %v305 = vld [vmem:[%s7 + $0x20] sm:$0xff]
  %v306 = vld [vmem:[%s7 + $0x28] sm:$0xff]
  %v307 = vld [vmem:[%s7 + $0x30] sm:$0xff]
  %v308 = vld [vmem:[%s7 + $0x38] sm:$0xff]
  %v309 = vld [vmem:[%s8] sm:$0x1]
  %v311 = vlaneseq
  %v312 = vshrl.u32 %v311, 7
  %v313 = vsub.s32 0, %v312
  %v314 = vrot.slane %v309, %v313
  %v317 = vsel %vm226, %v300, 0
  %319 = vmatprep.subr.mxu0 0.0
  %320 = vmatpush1.msra.mxu0 %v301
  %321 = vmatprep.subr.mxu0 0.0
  %322 = vmatpush1.msra.mxu0 %v302
  %323 = vmatprep.subr.mxu0 0.0
  %324 = vmatpush1.msra.mxu0 %v303
  %325 = vmatprep.subr.mxu0 0.0
  %326 = vmatpush1.msra.mxu0 %v304
  %327 = vmatprep.subr.mxu0 0.0
  %328 = vmatpush1.msra.mxu0 %v305
  %329 = vmatprep.subr.mxu0 0.0
  %330 = vmatpush1.msra.mxu0 %v306
  %331 = vmatprep.subr.mxu0 0.0
  %332 = vmatpush1.msra.mxu0 %v307
  %333 = vmatprep.subr.mxu0 0.0
  %334 = vmatpush1.msra.mxu0 %v308
  %335 = vmatprep.subr.mxu0 0.0
  %336 = vmatpush1.msra.mxu0 0.0
  %337 = vmatprep.subr.mxu0 0.0
  %338 = vmatpush1.msra.mxu0 0.0
  %339 = vmatprep.subr.mxu0 0.0
  %340 = vmatpush1.msra.mxu0 0.0
  %341 = vmatprep.subr.mxu0 0.0
  %342 = vmatpush1.msra.mxu0 0.0
  %343 = vmatprep.subr.mxu0 0.0
  %344 = vmatpush1.msra.mxu0 0.0
  %345 = vmatprep.subr.mxu0 0.0
  %346 = vmatpush1.msra.mxu0 0.0
  %347 = vmatprep.subr.mxu0 0.0
  %348 = vmatpush1.msra.mxu0 0.0
  %349 = vmatprep.subr.mxu0 0.0
  %350 = vmatpush1.msra.mxu0 0.0
  %351 = vmatprep.subr.mxu0 0.0
  %352 = vmatpush1.msra.mxu0 0.0
  %353 = vmatprep.subr.mxu0 0.0
  %354 = vmatpush1.msra.mxu0 0.0
  %355 = vmatprep.subr.mxu0 0.0
  %356 = vmatpush1.msra.mxu0 0.0
  %357 = vmatprep.subr.mxu0 0.0
  %358 = vmatpush1.msra.mxu0 0.0
  %359 = vmatprep.subr.mxu0 0.0
  %360 = vmatpush1.msra.mxu0 0.0
  %361 = vmatprep.subr.mxu0 0.0
  %362 = vmatpush1.msra.mxu0 0.0
  %363 = vmatprep.subr.mxu0 0.0
  %364 = vmatpush1.msra.mxu0 0.0
  %365 = vmatprep.subr.mxu0 0.0
  %366 = vmatpush1.msra.mxu0 0.0
  %367 = vmatprep.subr.mxu0 0.0
  %368 = vmatpush1.msra.mxu0 0.0
  %369 = vmatprep.subr.mxu0 0.0
  %370 = vmatpush1.msra.mxu0 0.0
  %371 = vmatprep.subr.mxu0 0.0
  %372 = vmatpush1.msra.mxu0 0.0
  %373 = vmatprep.subr.mxu0 0.0
  %374 = vmatpush1.msra.mxu0 0.0
  %375 = vmatprep.subr.mxu0 0.0
  %376 = vmatpush1.msra.mxu0 0.0
  %377 = vmatprep.subr.mxu0 0.0
  %378 = vmatpush1.msra.mxu0 0.0
  %379 = vmatprep.subr.mxu0 0.0
  %380 = vmatpush1.msra.mxu0 0.0
  %381 = vmatprep.subr.mxu0 0.0
  %382 = vmatpush1.msra.mxu0 0.0
  %383 = vmatprep.mubr.f32.mxu0 0.0
  %384 = vmatmul.mubr.f32.gmra.mrb[0].mxu0 %v317
  %v385 = vpop.f32.mrb[0].mxu0
  %v386 = vadd.f32 %v314, %v385
  %v387 = vpop.f32.mrb[0].mxu0
  %388 = vdwg.mxu0
  %vm389 = vcmask 31744
  %390 = vst.msk [vmem:[%s9] sm:$0xff] %vm389, %v386
  // Predicated region
  $region38: #{tpu_custom_call.1} parent=0 // pred_check
    _
  $region39: #{tpu_custom_call.1} parent=0 // pred_check_branch
    %392 = sbr.rel (0) target = $region41
  $region40: #{tpu_custom_call.1} parent=0 // pred_region
    _
  $region41: #{tpu_custom_call.1} parent=0 // pred_fallthru
    _
  // Predicated region
  $region42: #{tpu_custom_call.1} parent=0 // pred_check
    _
  $region43: #{tpu_custom_call.1} parent=0 // pred_check_branch
    %394 = sbr.rel (0) target = $region45
  $region44: #{tpu_custom_call.1} parent=0 // pred_region
    _
  $region45: #{tpu_custom_call.1} parent=0 // pred_fallthru
    _

</llo_original>
